<compile_context>
chip_gen: v7x
topology: tpu7x:2x2x1
jax: 0.10.0
libtpu: 0.0.40
codegen_flags: <defaults>
</compile_context>

<pallas_src>
import functools

import jax
import jax.numpy as jnp
from jax.experimental import pallas as pl
from jax.experimental.pallas import tpu as pltpu


def _round_up(v: int, m: int) -> int:
    return (v + m - 1) // m * m


def _make_skip_linear_kernel(single_col_tile: bool):
    """out_tile = x_tile[:, cols] + x_tile @ w_tile + b_tile (f32 accumulation)."""

    def kernel(x_ref, w_ref, b_ref, o_ref):
        # x_ref: (TM, Hp) f32   w_ref: (Hp, TN) bf16   b_ref: (1, TN) f32
        # o_ref: (TM, TN) f32
        tn = o_ref.shape[-1]
        x_f32 = x_ref[...]
        # bf16 operands feed the MXU at full rate; accumulate in f32.
        y = jnp.dot(x_f32.astype(jnp.bfloat16), w_ref[...],
                    preferred_element_type=jnp.float32)
        if single_col_tile:
            x_res = x_f32                        # this tile spans all of hidden
        else:
            # Residual columns of x matching this output tile (exact f32 skip path).
            col = pl.multiple_of(pl.program_id(1) * tn, tn)
            x_res = x_ref[:, pl.ds(col, tn)]
        o_ref[...] = (x_res + y + b_ref[...]).astype(o_ref.dtype)

    return kernel


@functools.partial(jax.jit, static_argnames=("tile_rows", "tile_cols"))
def skip_connection_linear(x, w, b, *, tile_rows=256, tile_cols=None):
    """x: (B, S, H); w: (H, H) stored (in, out) so y = x @ w; b: (H,)."""
    B, S, H = x.shape
    N = B * S

    # Pad hidden to a lane-dense multiple of 128 and rows to the row tile.
    Hp = _round_up(H, 128)
    tm = min(tile_rows, _round_up(N, 8))          # rows per grid step (multiple of 8)
    Np = _round_up(N, tm)

    if tile_cols is None:
        # Whole hidden in one weight tile when small (double-buffered bf16 tile
        # stays a few MiB); otherwise column-tile at 512 to bound VMEM for any H.
        tn = Hp if Hp <= 1024 else 512
    else:
        tn = min(_round_up(tile_cols, 128), Hp)
    n_col = Hp // tn

    x2 = x.reshape(N, H).astype(jnp.float32)
    if (Np, Hp) != (N, H):
        x2 = jnp.pad(x2, ((0, Np - N), (0, Hp - H)))
    w_p = w.astype(jnp.float32)
    if Hp != H:
        w_p = jnp.pad(w_p, ((0, Hp - H), (0, Hp - H)))
    w_bf16 = w_p.astype(jnp.bfloat16)             # MXU operand, half the HBM bytes
    b2 = b.astype(jnp.float32).reshape(1, H)
    if Hp != H:
        b2 = jnp.pad(b2, ((0, 0), (0, Hp - H)))

    # Rows outer / columns inner: the x row tile's block index is constant over
    # the inner axis, so each x row tile is DMAed exactly once.
    grid = (Np // tm, n_col)

    # VMEM: double-buffered x / w / b / out tiles + headroom for Mosaic scratch.
    # (Weight/bias tiles are bounded by the column tiling, so the second buffer
    #  of the grid-invariant weight costs at most a few MiB.)
    est_vmem = 2 * (tm * Hp * 4 + Hp * tn * 2 + tn * 4 + tm * tn * 4) + (8 << 20)
    vmem_limit = int(min(max(est_vmem, 16 << 20), 48 << 20))   # v7x-safe (< 64 MiB)

    cost = pl.CostEstimate(
        flops=2 * Np * Hp * Hp,
        transcendentals=0,
        bytes_accessed=Np * Hp * 4 + Hp * Hp * 2 + Hp * 4 + Np * Hp * 4,
    )

    kernel = _make_skip_linear_kernel(single_col_tile=(n_col == 1))

    out = pl.pallas_call(
        kernel,
        out_shape=jax.ShapeDtypeStruct((Np, Hp), jnp.float32),
        grid_spec=pltpu.PrefetchScalarGridSpec(
            num_scalar_prefetch=0,
            grid=grid,
            in_specs=[
                pl.BlockSpec((tm, Hp), lambda i, j: (i, 0)),   # x rows (full K)
                pl.BlockSpec((Hp, tn), lambda i, j: (0, j)),   # weight column tile
                pl.BlockSpec((1, tn), lambda i, j: (0, j)),    # bias column tile
            ],
            out_specs=pl.BlockSpec((tm, tn), lambda i, j: (i, j)),
        ),
        compiler_params=pltpu.CompilerParams(
            dimension_semantics=("parallel", "parallel"),
            vmem_limit_bytes=vmem_limit,
        ),
        cost_estimate=cost,
        input_output_aliases={0: 0},   # x slab fully read before its tile is written
    )(x2, w_bf16, b2)

    return out[:N, :H].reshape(B, S, H).astype(x.dtype)


if __name__ == "__main__":
    B, S, H = 2, 8, 128   # hidden kept a multiple of 128 for lane-dense stores

    key = jax.random.PRNGKey(0)
    kx, kw, kb = jax.random.split(key, 3)

    x = jax.random.normal(kx, (B, S, H), dtype=jnp.float32)

    # Deterministic nn.Linear(H, H) init (uniform(-1/sqrt(H), 1/sqrt(H))).
    bound = 1.0 / (H ** 0.5)
    w_t = jax.random.uniform(kw, (H, H), minval=-bound, maxval=bound,
                             dtype=jnp.float32)   # stored (in, out): y = x @ w_t
    b = jax.random.uniform(kb, (H,), minval=-bound, maxval=bound,
                           dtype=jnp.float32)

    out = skip_connection_linear(x, w_t, b)
    out = jax.block_until_ready(out)
    assert out.shape == x.shape

    # Reference matching the kernel math: bf16 MXU matmul, f32 residual + bias.
    y_ref = jnp.dot(x.reshape(-1, H).astype(jnp.bfloat16),
                    w_t.astype(jnp.bfloat16),
                    preferred_element_type=jnp.float32).reshape(B, S, H)
    ref = x + y_ref + b
    assert jnp.allclose(out, ref, atol=2e-3, rtol=2e-3), \
        float(jnp.max(jnp.abs(out - ref)))

    # Loose sanity check against the exact f32 module as well.
    ref_f32 = x + (x.reshape(-1, H) @ w_t + b).reshape(B, S, H)
    assert jnp.allclose(out, ref_f32, atol=3e-2, rtol=3e-2)

    print("KERNEL_OK")
</pallas_src>

<mosaic_0001>
module attributes {stable_mosaic.version = 11 : i64} {
  func.func @kernel(%arg0: i32, %arg1: i32, %arg2: memref<16x128xf32, #tpu.memory_space<vmem>>, %arg3: memref<128x128xbf16, #tpu.memory_space<vmem>>, %arg4: memref<1x128xf32, #tpu.memory_space<vmem>>, %arg5: memref<16x128xf32, #tpu.memory_space<vmem>>) attributes {dimension_semantics = [#tpu.dimension_semantics<parallel>, #tpu.dimension_semantics<parallel>], iteration_bounds = array<i64: 1, 1>, scalar_prefetch = 0 : i64, scratch_operands = 0 : i64, tpu.core_type = #tpu.core_type<tc>, window_params = [{transform_indices = @transform_0, window_bounds = array<i64: 16, 128>}, {transform_indices = @transform_1, window_bounds = array<i64: 128, 128>}, {transform_indices = @transform_2, window_bounds = array<i64: 1, 128>}, {transform_indices = @transform_3, window_bounds = array<i64: 16, 128>}]} {
    %c0 = arith.constant 0 : index
    %c0_0 = arith.constant 0 : index
    %0 = vector.load %arg2[%c0, %c0_0] : memref<16x128xf32, #tpu.memory_space<vmem>>, vector<16x128xf32>
    %1 = arith.truncf %0 : vector<16x128xf32> to vector<16x128xbf16>
    %c0_1 = arith.constant 0 : index
    %c0_2 = arith.constant 0 : index
    %2 = vector.load %arg3[%c0_1, %c0_2] : memref<128x128xbf16, #tpu.memory_space<vmem>>, vector<128x128xbf16>
    %cst = arith.constant dense<0.000000e+00> : vector<16x128xf32>
    %3 = tpu.matmul %1, %2, %cst {dimension_numbers = #tpu.dot_dimension_numbers<[1], [0], [0], [1], [0, 0, 1, 1], [], []>} : vector<16x128xbf16>, vector<128x128xbf16>, vector<16x128xf32> -> vector<16x128xf32>
    %4 = arith.addf %0, %3 : vector<16x128xf32>
    %c0_3 = arith.constant 0 : index
    %c0_4 = arith.constant 0 : index
    %5 = vector.load %arg4[%c0_3, %c0_4] : memref<1x128xf32, #tpu.memory_space<vmem>>, vector<1x128xf32>
    %6 = vector.broadcast %5 : vector<1x128xf32> to vector<16x128xf32>
    %7 = arith.addf %4, %6 : vector<16x128xf32>
    %c0_5 = arith.constant 0 : index
    %c0_6 = arith.constant 0 : index
    %8 = vector.load %arg5[%c0_5, %c0_6] : memref<16x128xf32, #tpu.memory_space<vmem>>, vector<16x128xf32>
    tpu.vector_store %arg5[%c0_5, %c0_6], %7 {strides = array<i32>} : memref<16x128xf32, #tpu.memory_space<vmem>>, vector<16x128xf32>,
    return
  }
  func.func @transform_0(%arg0: i32, %arg1: i32) -> (i32, i32) {
    %c0_i32 = arith.constant 0 : i32
    %c0_i32_0 = arith.constant 0 : i32
    return %arg0, %c0_i32 : i32, i32
  }
  func.func @transform_1(%arg0: i32, %arg1: i32) -> (i32, i32) {
    %c0_i32 = arith.constant 0 : i32
    %c0_i32_0 = arith.constant 0 : i32
    return %c0_i32, %arg1 : i32, i32
  }
  func.func @transform_2(%arg0: i32, %arg1: i32) -> (i32, i32) {
    %c0_i32 = arith.constant 0 : i32
    %c0_i32_0 = arith.constant 0 : i32
    return %c0_i32, %arg1 : i32, i32
  }
  func.func @transform_3(%arg0: i32, %arg1: i32) -> (i32, i32) {
    %c0_i32 = arith.constant 0 : i32
    return %arg0, %arg1 : i32, i32
  }
}

</mosaic_0001>

<llo_original>
// kernel: skip_connection_linear.1
$region0: #{skip_connection_linear.1}
  #allocation0 [shape = 'u32[]', space=smem, size = 0x4, offset = 0x4, fixed_abs, tag = 'smem constant byte address 0x4 - core index']
  #allocation1 [shape = 'u32[144,128]{1,0:T(1,128)}', space=vmem, size = 0x12000, scoped, tag = 'internal scratch']
  %s0 = inlined_call_operand.vmem [shape: f32[16,128], index: 0, kind: input, shape index: {}, may-alias: {0,3}]
  %s1 = inlined_call_operand.vmem [shape: bf16[128,128], index: 1, kind: input, shape index: {}]
  %s2 = inlined_call_operand.vmem [shape: f32[1,128], index: 2, kind: input, shape index: {}]
  %s3 = inlined_call_operand.vmem [shape: f32[16,128], index: 3, kind: output, shape index: {}, may-alias: {0,3}]
  %s4 = sld [smem:[#allocation0]]
  $region22: #{skip_connection_linear.1} parent=0
    _
  %s6 = ssub.s32 1, %s4
  %s7 = scalar_select 0, %s6, %s4
  // Predicated region
  $region2: #{skip_connection_linear.1} parent=0 // pred_check
    _
  $region3: #{skip_connection_linear.1} parent=0 // pred_check_branch
    %9 = sbr.rel (0) target = $region5
  $region4: #{skip_connection_linear.1} parent=0 // pred_region
    _
  $region5: #{skip_connection_linear.1} parent=0 // pred_fallthru
    _
  // Predicated region
  $region6: #{skip_connection_linear.1} parent=0 // pred_check
    _
  $region7: #{skip_connection_linear.1} parent=0 // pred_check_branch
    %11 = sbr.rel (0) target = $region9
  $region8: #{skip_connection_linear.1} parent=0 // pred_region
    _
  $region9: #{skip_connection_linear.1} parent=0 // pred_fallthru
    _
  // Predicated region
  $region10: #{skip_connection_linear.1} parent=0 // pred_check
    _
  $region11: #{skip_connection_linear.1} parent=0 // pred_check_branch
    %13 = sbr.rel (0) target = $region13
  $region12: #{skip_connection_linear.1} parent=0 // pred_region
    _
  $region13: #{skip_connection_linear.1} parent=0 // pred_fallthru
    _
  %v15 = vld [vmem:[%s0] sm:$0xff]
  %v16 = vld [vmem:[%s0 + $0x8] sm:$0xff]
  %v17 = vpack.c.bf16 %v16, %v15
  %v18 = vld [vmem:[%s1] sm:$0xf]
  %v19 = vld [vmem:[%s1 + $0x4] sm:$0xf]
  %v20 = vld [vmem:[%s1 + $0x8] sm:$0xf]
  %v21 = vld [vmem:[%s1 + $0xc] sm:$0xf]
  %v22 = vld [vmem:[%s1 + $0x10] sm:$0xf]
  %v23 = vld [vmem:[%s1 + $0x14] sm:$0xf]
  %v24 = vld [vmem:[%s1 + $0x18] sm:$0xf]
  %v25 = vld [vmem:[%s1 + $0x1c] sm:$0xf]
  %v26 = vld [vmem:[%s1 + $0x20] sm:$0xf]
  %v27 = vld [vmem:[%s1 + $0x24] sm:$0xf]
  %v28 = vld [vmem:[%s1 + $0x28] sm:$0xf]
  %v29 = vld [vmem:[%s1 + $0x2c] sm:$0xf]
  %v30 = vld [vmem:[%s1 + $0x30] sm:$0xf]
  %v31 = vld [vmem:[%s1 + $0x34] sm:$0xf]
  %v32 = vld [vmem:[%s1 + $0x38] sm:$0xf]
  %v33 = vld [vmem:[%s1 + $0x3c] sm:$0xf]
  %v50 = vunpack.c.l.b16 %v18
  %v51 = vunpack.c.l.b16 %v19
  %v52 = vunpack.c.l.b16 %v20
  %v53 = vunpack.c.l.b16 %v21
  %v54 = vunpack.c.l.b16 %v22
  %v55 = vunpack.c.l.b16 %v23
  %v56 = vunpack.c.l.b16 %v24
  %v57 = vunpack.c.l.b16 %v25
  %v58 = vunpack.c.l.b16 %v26
  %v59 = vunpack.c.l.b16 %v27
  %v60 = vunpack.c.l.b16 %v28
  %v61 = vunpack.c.l.b16 %v29
  %v62 = vunpack.c.l.b16 %v30
  %v63 = vunpack.c.l.b16 %v31
  %v64 = vunpack.c.l.b16 %v32
  %v65 = vunpack.c.l.b16 %v33
  %v66 = vpack.c.b16 %v51, %v50
  %v67 = vpack.c.b16 %v53, %v52
  %v68 = vpack.c.b16 %v55, %v54
  %v69 = vpack.c.b16 %v57, %v56
  %v70 = vpack.c.b16 %v59, %v58
  %v71 = vpack.c.b16 %v61, %v60
  %v72 = vpack.c.b16 %v63, %v62
  %v73 = vpack.c.b16 %v65, %v64
  %82 = vmatprep.subr.bf16.mxu0 0
  %83 = vmatpush1.bf16.msra.mxu0 %v66
  %84 = vmatprep.subr.bf16.mxu0 0
  %85 = vmatpush1.bf16.msra.mxu0 %v67
  %86 = vmatprep.subr.bf16.mxu0 0
  %87 = vmatpush1.bf16.msra.mxu0 %v68
  %88 = vmatprep.subr.bf16.mxu0 0
  %89 = vmatpush1.bf16.msra.mxu0 %v69
  %90 = vmatprep.subr.bf16.mxu0 0
  %91 = vmatpush1.bf16.msra.mxu0 %v70
  %92 = vmatprep.subr.bf16.mxu0 0
  %93 = vmatpush1.bf16.msra.mxu0 %v71
  %94 = vmatprep.subr.bf16.mxu0 0
  %95 = vmatpush1.bf16.msra.mxu0 %v72
  %96 = vmatprep.subr.bf16.mxu0 0
  %97 = vmatpush1.bf16.msra.mxu0 %v73
  %98 = vmatprep.subr.bf16.mxu0 0
  %99 = vmatpush1.bf16.msra.mxu0 0
  %100 = vmatprep.subr.bf16.mxu0 0
  %101 = vmatpush1.bf16.msra.mxu0 0
  %102 = vmatprep.subr.bf16.mxu0 0
  %103 = vmatpush1.bf16.msra.mxu0 0
  %104 = vmatprep.subr.bf16.mxu0 0
  %105 = vmatpush1.bf16.msra.mxu0 0
  %106 = vmatprep.subr.bf16.mxu0 0
  %107 = vmatpush1.bf16.msra.mxu0 0
  %108 = vmatprep.subr.bf16.mxu0 0
  %109 = vmatpush1.bf16.msra.mxu0 0
  %110 = vmatprep.subr.bf16.mxu0 0
  %111 = vmatpush1.bf16.msra.mxu0 0
  %112 = vmatprep.subr.bf16.mxu0 0
  %113 = vmatpush1.bf16.msra.mxu0 0
  %114 = vmatprep.mubr.bf16.mxu0 0
  %115 = vmatmul.mubr.bf16.gmra.mrb[0].mxu0 %v17
  %v116 = vpop.f32.mrb[0].mxu0
  %v117 = vadd.f32 0.0, %v116
  %v118 = vpop.f32.mrb[0].mxu0
  %v119 = vpop.f32.mrb[0].mxu0
  %v120 = vadd.f32 0.0, %v119
  %v121 = vpop.f32.mrb[0].mxu0
  %122 = vdwg.mxu0
  %v123 = vadd.f32 %v15, %v117
  %v124 = vadd.f32 %v16, %v120
  %v125 = vld [vmem:[%s2] sm:$0x1]
  %v127 = vlaneseq
  %v128 = vshrl.u32 %v127, 7
  %v129 = vsub.s32 0, %v128
  %v130 = vrot.slane %v125, %v129
  %v132 = vadd.f32 %v123, %v130
  %v133 = vadd.f32 %v124, %v130
  %134 = vst [vmem:[%s3] sm:$0xff] %v132
  %135 = vst [vmem:[%s3 + $0x8] sm:$0xff] %v133
  // Predicated region
  $region14: #{skip_connection_linear.1} parent=0 // pred_check
    _
  $region15: #{skip_connection_linear.1} parent=0 // pred_check_branch
    %137 = sbr.rel (0) target = $region17
  $region16: #{skip_connection_linear.1} parent=0 // pred_region
    _
  $region17: #{skip_connection_linear.1} parent=0 // pred_fallthru
    _
  // Predicated region
  $region18: #{skip_connection_linear.1} parent=0 // pred_check
    _
  $region19: #{skip_connection_linear.1} parent=0 // pred_check_branch
    %139 = sbr.rel (0) target = $region21
  $region20: #{skip_connection_linear.1} parent=0 // pred_region
    _
  $region21: #{skip_connection_linear.1} parent=0 // pred_fallthru
    _

</llo_original>
